<compile_context>
chip_gen: v7x
topology: tpu7x:2x2x1
jax: 0.10.0
libtpu: 0.0.40
codegen_flags: <defaults>
</compile_context>

<pallas_src>
import functools

import jax
import jax.numpy as jnp
from jax.experimental import pallas as pl
from jax.experimental.pallas import tpu as pltpu


# ----------------------------------------------------------------------------
# Helpers
# ----------------------------------------------------------------------------
def _round_up(x, m):
    return ((x + m - 1) // m) * m


def _vmem_limit_bytes():
    """Per-generation VMEM limit (v7x has 64 MiB physical vs 128 MiB on v5e/v6e)."""
    try:
        phys = pltpu.get_tpu_info().vmem_capacity_bytes
    except Exception:
        phys = 64 * 1024 * 1024  # conservative (v7x) fallback
    return min(int(phys * 0.7), 100 * 1024 * 1024)


def _select_tiles(B, Dp, Fp, K, budget_bytes):
    """Pick (tm, tk, Bp): batch tile, reduction tile, padded batch size."""
    Bp_min = _round_up(B, 8)

    # Small-problem fast path: single grid step, no reduction tiling, no per-step overhead.
    full_bytes = (2 * Bp_min * Dp * 4          # x double buffer (f32)
                  + 2 * Dp * Fp * 2            # backbone weight double buffer (bf16)
                  + Bp_min * Fp * 4            # f32 feature accumulator
                  + Fp * K * 4 + 2 * Bp_min * K * 4)
    if full_bytes <= min(8 << 20, budget_bytes):
        return Bp_min, Dp, Bp_min

    # Reduction tile: largest multiple-of-128 divisor of the (already 128-padded) Dp, <= 512.
    tk = 128
    for cand in range(min(512, Dp), 127, -128):
        if Dp % cand == 0:
            tk = cand
            break

    # Batch tile: as large as the VMEM budget allows (roofline sweet spot >= 512 rows),
    # capped at 1024 and at the padded batch size.
    wb_bytes = 2 * tk * Fp * 2
    per_row = 2 * tk * 4 + Fp * 4 + 2 * K * 4
    tm_cap = (budget_bytes - wb_bytes - Fp * K * 4) // per_row
    tm_cap = max(8, min(1024, (tm_cap // 8) * 8, Bp_min))

    n_tiles = -(-Bp_min // tm_cap)
    # Give both TensorCores a batch tile on multi-core chips (v7x) when B is large enough.
    if Bp_min >= 512:
        n_tiles = max(n_tiles, 2)
    tm = _round_up(-(-Bp_min // n_tiles), 8)
    Bp = n_tiles * tm
    return tm, tk, Bp


# ----------------------------------------------------------------------------
# Fused kernel: tiled backbone matmul (bf16 MXU, f32 acc) + cosine-sim + softmax epilogue
# Grid: (Bp // tm, Dp // tk) -- axis 0 batch ("parallel"), axis 1 reduction ("arbitrary")
# ----------------------------------------------------------------------------
def _fused_asoftmax_kernel(x_ref, wb_ref, wt_ref, wnorm_ref, o_ref, acc_ref, *, rou, stable):
    k = pl.program_id(1)

    @pl.when(k == 0)
    def _init():
        acc_ref[...] = jnp.zeros_like(acc_ref)

    # Cast the streamed x tile to bf16 on the VPU (hidden under the DMA); f32 accumulate.
    acc_ref[...] += jnp.dot(
        x_ref[...].astype(jnp.bfloat16), wb_ref[...],
        preferred_element_type=jnp.float32,
    )

    @pl.when(k == pl.num_programs(1) - 1)
    def _epilogue():
        feat = acc_ref[...]                                  # (tm, Fp) f32, still in VMEM
        # dots[b, c] = <feat[b], W[c]>  -- W pre-transposed to (Fp, K) in the wrapper.
        dots = jnp.dot(feat, wt_ref[...], preferred_element_type=jnp.float32)   # (tm, K)

        # torch.nn.CosineSimilarity(eps=1e-8): clamp the *product* of the norms.
        xnorm = jnp.sqrt(jnp.sum(feat * feat, axis=-1, keepdims=True))          # (tm, 1)
        denom = jnp.maximum(xnorm * wnorm_ref[...], 1e-8)                       # (tm, K)
        z = rou * (dots / denom)

        # cos is in [-1, 1]; for small |rou| exp(rou*cos) cannot overflow, so the
        # max-subtraction (cross-lane XLU reduction) is skipped.
        if stable:
            z = z - jnp.max(z, axis=-1, keepdims=True)
        e = jnp.exp(z)
        o_ref[...] = (e / jnp.sum(e, axis=-1, keepdims=True)).astype(o_ref.dtype)


# ----------------------------------------------------------------------------
# Parameter setup (done once, outside the per-forward hot path)
# ----------------------------------------------------------------------------
def prepare_asoftmax_params(backbone_w, W):
    """Returns (wb_bf16 (Dp,Fp), wt_f32 (Fp,K), wnorm (1,K)). D padded to 128, F padded to 128."""
    D, F = backbone_w.shape
    K = W.shape[0]
    Dp = _round_up(D, 128)
    Fp = _round_up(max(F, 128), 128)

    wb = jnp.zeros((Dp, Fp), jnp.bfloat16)
    wb = wb.at[:D, :F].set(backbone_w.astype(jnp.bfloat16))

    w_f32 = W.astype(jnp.float32)
    wt = jnp.zeros((Fp, K), jnp.float32)
    wt = wt.at[:F, :].set(w_f32.T)                            # pre-transposed, zero-padded F

    wnorm = jnp.sqrt(jnp.sum(w_f32 * w_f32, axis=1)).reshape(1, K)
    return wb, wt, wnorm


# ----------------------------------------------------------------------------
# Forward
# ----------------------------------------------------------------------------
def asoftmax_forward(x_nchw, wb, wt, wnorm, rou=1.0):
    """Fused ASoftmax forward: flatten -> dense backbone -> cosine-sim -> softmax."""
    B = x_nchw.shape[0]
    x_flat = x_nchw.reshape(B, -1)                            # (B, D), original dtype
    D = x_flat.shape[1]
    Dp, Fp = wb.shape
    K = wt.shape[1]
    assert Dp >= D and wnorm.shape == (1, K)

    vmem_limit = _vmem_limit_bytes()
    tm, tk, Bp = _select_tiles(B, Dp, Fp, K, int(vmem_limit * 0.85))

    # Zero-pad batch (to a multiple of tm) and reduction dim (only if D wasn't 128-aligned).
    # Zero rows/cols contribute nothing to the matmul or the norms.
    if (Bp, Dp) != (B, D):
        x_flat = jnp.pad(x_flat, ((0, Bp - B), (0, Dp - D)))

    grid = (Bp // tm, Dp // tk)
    stable = abs(float(rou)) > 20.0

    out = pl.pallas_call(
        functools.partial(_fused_asoftmax_kernel, rou=float(rou), stable=stable),
        out_shape=jax.ShapeDtypeStruct((Bp, K), jnp.float32),
        grid_spec=pltpu.PrefetchScalarGridSpec(
            num_scalar_prefetch=0,
            grid=grid,
            in_specs=[
                pl.BlockSpec((tm, tk), lambda i, k: (i, k)),   # x tile (original dtype)
                pl.BlockSpec((tk, Fp), lambda i, k: (k, 0)),   # backbone weight tile (bf16)
                pl.BlockSpec((Fp, K), lambda i, k: (0, 0)),    # W^T, resident across grid
                pl.BlockSpec((1, K), lambda i, k: (0, 0)),     # ||W[k]||, resident
            ],
            out_specs=pl.BlockSpec((tm, K), lambda i, k: (i, 0)),
            scratch_shapes=[pltpu.VMEM((tm, Fp), jnp.float32)],  # f32 feature accumulator
        ),
        compiler_params=pltpu.CompilerParams(
            dimension_semantics=("parallel", "arbitrary"),
            vmem_limit_bytes=vmem_limit,
        ),
    )(x_flat, wb, wt, wnorm)

    return out[:B]


if __name__ == "__main__":
    # Small shapes consistent with the module.
    B, C, H, Wd = 2, 4, 16, 16
    num_clusters = 8
    num_features = 32
    D = C * H * Wd

    key = jax.random.PRNGKey(0)
    k_x, k_bb, k_w = jax.random.split(key, 3)

    x = jax.random.normal(k_x, (B, C, H, Wd), dtype=jnp.float32)
    backbone_w = jax.random.normal(k_bb, (D, num_features), dtype=jnp.float32) * 0.05
    W = jax.random.normal(k_w, (num_clusters, num_features), dtype=jnp.float32)

    # One-time parameter preparation (bf16 conversion / padding hoisted out of the forward).
    wb, wt, wnorm = prepare_asoftmax_params(backbone_w, W)

    out = asoftmax_forward(x, wb, wt, wnorm, rou=1.0)
    out = jax.block_until_ready(out)

    # Reference in plain JAX with the same bf16-operand / f32-accumulate backbone matmul.
    x_flat = x.reshape(B, -1)
    feat_ref = jnp.dot(
        x_flat.astype(jnp.bfloat16),
        backbone_w.astype(jnp.bfloat16),
        preferred_element_type=jnp.float32,
    )
    dots = feat_ref @ W.T
    denom = jnp.maximum(
        jnp.linalg.norm(feat_ref, axis=1, keepdims=True)
        * jnp.linalg.norm(W, axis=1, keepdims=True).T,
        1e-8,
    )
    ref = jax.nn.softmax(dots / denom, axis=1)

    assert out.shape == (B, num_clusters)
    assert jnp.allclose(out, ref, atol=2e-4, rtol=2e-4), (out, ref)
    assert jnp.allclose(jnp.sum(out, axis=1), 1.0, atol=1e-5)

    print("KERNEL_OK")
</pallas_src>

<mosaic_0001>
module attributes {stable_mosaic.version = 11 : i64} {
  func.func @_fused_asoftmax_kernel(%arg0: i32, %arg1: i32, %arg2: memref<8x1024xf32, #tpu.memory_space<vmem>>, %arg3: memref<1024x128xbf16, #tpu.memory_space<vmem>>, %arg4: memref<128x8xf32, #tpu.memory_space<vmem>>, %arg5: memref<1x8xf32, #tpu.memory_space<vmem>>, %arg6: memref<8x8xf32, #tpu.memory_space<vmem>>, %arg7: memref<8x128xf32, #tpu.memory_space<vmem>>) attributes {dimension_semantics = [#tpu.dimension_semantics<parallel>, #tpu.dimension_semantics<arbitrary>], iteration_bounds = array<i64: 1, 1>, scalar_prefetch = 0 : i64, scratch_operands = 1 : i64, tpu.core_type = #tpu.core_type<tc>, window_params = [{transform_indices = @transform_0, window_bounds = array<i64: 8, 1024>}, {transform_indices = @transform_1, window_bounds = array<i64: 1024, 128>}, {pipeline_mode = #tpu.pipeline_mode<synchronous>, transform_indices = @transform_2, window_bounds = array<i64: 128, 8>}, {pipeline_mode = #tpu.pipeline_mode<synchronous>, transform_indices = @transform_3, window_bounds = array<i64: 1, 8>}, {transform_indices = @transform_4, window_bounds = array<i64: 8, 8>}]} {
    %c0_i32 = arith.constant 0 : i32
    %0 = arith.cmpi eq, %arg1, %c0_i32 : i32
    %1 = arith.extui %0 : i1 to i32
    %c0_i32_0 = arith.constant 0 : i32
    %2 = arith.cmpi ne, %1, %c0_i32_0 : i32
    scf.if %2 {
      %cst_10 = arith.constant 0.000000e+00 : f32
      %13 = vector.broadcast %cst_10 : f32 to vector<8x128xf32>
      %c0_11 = arith.constant 0 : index
      %c0_12 = arith.constant 0 : index
      %14 = vector.load %arg7[%c0_11, %c0_12] : memref<8x128xf32, #tpu.memory_space<vmem>>, vector<8x128xf32>
      tpu.vector_store %arg7[%c0_11, %c0_12], %13 {strides = array<i32>} : memref<8x128xf32, #tpu.memory_space<vmem>>, vector<8x128xf32>,
    } else {
    }
    %c0 = arith.constant 0 : index
    %c0_1 = arith.constant 0 : index
    %3 = vector.load %arg7[%c0, %c0_1] : memref<8x128xf32, #tpu.memory_space<vmem>>, vector<8x128xf32>
    %c0_2 = arith.constant 0 : index
    %c0_3 = arith.constant 0 : index
    %4 = vector.load %arg2[%c0_2, %c0_3] : memref<8x1024xf32, #tpu.memory_space<vmem>>, vector<8x1024xf32>
    %5 = arith.truncf %4 : vector<8x1024xf32> to vector<8x1024xbf16>
    %c0_4 = arith.constant 0 : index
    %c0_5 = arith.constant 0 : index
    %6 = vector.load %arg3[%c0_4, %c0_5] : memref<1024x128xbf16, #tpu.memory_space<vmem>>, vector<1024x128xbf16>
    %cst = arith.constant dense<0.000000e+00> : vector<8x128xf32>
    %7 = tpu.matmul %5, %6, %cst {dimension_numbers = #tpu.dot_dimension_numbers<[1], [0], [0], [1], [0, 0, 1, 1], [], []>} : vector<8x1024xbf16>, vector<1024x128xbf16>, vector<8x128xf32> -> vector<8x128xf32>
    %8 = arith.addf %3, %7 : vector<8x128xf32>
    %c0_6 = arith.constant 0 : index
    %c0_7 = arith.constant 0 : index
    %9 = vector.load %arg7[%c0_6, %c0_7] : memref<8x128xf32, #tpu.memory_space<vmem>>, vector<8x128xf32>
    tpu.vector_store %arg7[%c0_6, %c0_7], %8 {strides = array<i32>} : memref<8x128xf32, #tpu.memory_space<vmem>>, vector<8x128xf32>,
    %c0_i32_8 = arith.constant 0 : i32
    %10 = arith.cmpi eq, %arg1, %c0_i32_8 : i32
    %11 = arith.extui %10 : i1 to i32
    %c0_i32_9 = arith.constant 0 : i32
    %12 = arith.cmpi ne, %11, %c0_i32_9 : i32
    scf.if %12 {
      %c0_10 = arith.constant 0 : index
      %c0_11 = arith.constant 0 : index
      %13 = vector.load %arg7[%c0_10, %c0_11] : memref<8x128xf32, #tpu.memory_space<vmem>>, vector<8x128xf32>
      %c0_12 = arith.constant 0 : index
      %c0_13 = arith.constant 0 : index
      %14 = vector.load %arg4[%c0_12, %c0_13] : memref<128x8xf32, #tpu.memory_space<vmem>>, vector<128x8xf32>
      %cst_14 = arith.constant dense<0.000000e+00> : vector<8x8xf32>
      %15 = tpu.matmul %13, %14, %cst_14 {dimension_numbers = #tpu.dot_dimension_numbers<[1], [0], [0], [1], [0, 0, 1, 1], [], []>} : vector<8x128xf32>, vector<128x8xf32>, vector<8x8xf32> -> vector<8x8xf32>
      %16 = arith.mulf %13, %13 : vector<8x128xf32>
      %cst_15 = arith.constant dense<0.000000e+00> : vector<8xf32>
      %17 = vector.multi_reduction <add>, %16, %cst_15 [1] : vector<8x128xf32> to vector<8xf32>
      %18 = vector.shape_cast %17 : vector<8xf32> to vector<8x1xf32>
      %19 = math.sqrt %18 : vector<8x1xf32>
      %c0_16 = arith.constant 0 : index
      %c0_17 = arith.constant 0 : index
      %20 = vector.load %arg5[%c0_16, %c0_17] : memref<1x8xf32, #tpu.memory_space<vmem>>, vector<1x8xf32>
      %21 = vector.broadcast %19 : vector<8x1xf32> to vector<8x8xf32>
      %22 = vector.broadcast %20 : vector<1x8xf32> to vector<8x8xf32>
      %23 = arith.mulf %21, %22 : vector<8x8xf32>
      %cst_18 = arith.constant 9.99999993E-9 : f32
      %24 = vector.broadcast %cst_18 : f32 to vector<8x8xf32>
      %25 = arith.maximumf %23, %24 : vector<8x8xf32>
      %26 = arith.divf %15, %25 : vector<8x8xf32>
      %cst_19 = arith.constant 1.000000e+00 : f32
      %27 = vector.broadcast %cst_19 : f32 to vector<8x8xf32>
      %28 = arith.mulf %27, %26 : vector<8x8xf32>
      %29 = math.exp %28 : vector<8x8xf32>
      %cst_20 = arith.constant dense<0.000000e+00> : vector<8xf32>
      %30 = vector.multi_reduction <add>, %29, %cst_20 [1] : vector<8x8xf32> to vector<8xf32>
      %31 = vector.shape_cast %30 : vector<8xf32> to vector<8x1xf32>
      %32 = vector.broadcast %31 : vector<8x1xf32> to vector<8x8xf32>
      %33 = arith.divf %29, %32 : vector<8x8xf32>
      %c0_21 = arith.constant 0 : index
      %c0_22 = arith.constant 0 : index
      %34 = vector.load %arg6[%c0_21, %c0_22] : memref<8x8xf32, #tpu.memory_space<vmem>>, vector<8x8xf32>
      tpu.vector_store %arg6[%c0_21, %c0_22], %33 {strides = array<i32>} : memref<8x8xf32, #tpu.memory_space<vmem>>, vector<8x8xf32>,
    } else {
    }
    return
  }
  func.func @transform_0(%arg0: i32, %arg1: i32) -> (i32, i32) {
    %c0_i32 = arith.constant 0 : i32
    return %arg0, %arg1 : i32, i32
  }
  func.func @transform_1(%arg0: i32, %arg1: i32) -> (i32, i32) {
    %c0_i32 = arith.constant 0 : i32
    %c0_i32_0 = arith.constant 0 : i32
    return %arg1, %c0_i32 : i32, i32
  }
  func.func @transform_2(%arg0: i32, %arg1: i32) -> (i32, i32) {
    %c0_i32 = arith.constant 0 : i32
    %c0_i32_0 = arith.constant 0 : i32
    %c0_i32_1 = arith.constant 0 : i32
    return %c0_i32, %c0_i32_0 : i32, i32
  }
  func.func @transform_3(%arg0: i32, %arg1: i32) -> (i32, i32) {
    %c0_i32 = arith.constant 0 : i32
    %c0_i32_0 = arith.constant 0 : i32
    %c0_i32_1 = arith.constant 0 : i32
    return %c0_i32, %c0_i32_0 : i32, i32
  }
  func.func @transform_4(%arg0: i32, %arg1: i32) -> (i32, i32) {
    %c0_i32 = arith.constant 0 : i32
    %c0_i32_0 = arith.constant 0 : i32
    return %arg0, %c0_i32 : i32, i32
  }
}

</mosaic_0001>

<llo_original>
// kernel: tpu_custom_call.1
$region0: #{tpu_custom_call.1}
  #allocation0 [shape = 'u32[]', space=smem, size = 0x4, offset = 0x4, fixed_abs, tag = 'smem constant byte address 0x4 - core index']
  #allocation1 [shape = 'u32[144,128]{1,0:T(1,128)}', space=vmem, size = 0x12000, scoped, tag = 'internal scratch']
  #allocation2 [shape = 'f32[8,128]{1,0:T(8,128)}', space=vmem, size = 0x1000, scoped, tag = 'scratch operand']
  %s0 = inlined_call_operand.vmem [shape: f32[8,1024], index: 0, kind: input, shape index: {}]
  %s1 = inlined_call_operand.hbm [shape: bf16[1024,128], index: 1, kind: input, shape index: {}]
  %s2 = inlined_call_operand.vmem [shape: f32[128,8], index: 2, kind: input, shape index: {}]
  %s3 = inlined_call_operand.vmem [shape: f32[1,8], index: 3, kind: input, shape index: {}]
  %s4 = inlined_call_operand.hbm [shape: f32[8,8], index: 4, kind: output, shape index: {}]
  %s5 = sld [smem:[#allocation0]]
  $region38: #{tpu_custom_call.1} parent=0
    _
  %s7 = ssub.s32 1, %s5
  %s8 = scalar_select 0, %s7, %s5
  $region1: #{tpu_custom_call.1} parent=0
    #allocation3 [shape = 'u8[262144]{0}', space=vmem, size = 0x40000, scoped, tag = 'input window, operand 1, single buffered']
    #allocation4 [shape = 's32[1]{0}', space=sflag, size = 0x4, scoped, tag = 'scoped memory for tpu_custom_call.1']
    #allocation5 [shape = 's32[1]{0}', space=sflag, size = 0x4, scoped, tag = 'scoped memory for tpu_custom_call.1']
    #allocation6 [shape = 'u8[4096]{0}', space=vmem, size = 0x1000, scoped, tag = 'output window, operand 0, single buffered']
    %9 = vsyncpa [#allocation4], 0
    %10 = vsyncpa [#allocation5], 0
    // Predicated region
    $region2: #{tpu_custom_call.1} parent=1 // pred_check
      _
    $region3: #{tpu_custom_call.1} parent=1 // pred_check_branch
      %12 = sbr.rel (0) target = $region5
    $region4: #{tpu_custom_call.1} parent=1 // pred_region
      _
    $region5: #{tpu_custom_call.1} parent=1 // pred_fallthru
      _
    // Predicated region
    $region6: #{tpu_custom_call.1} parent=1 // pred_check
      _
    $region7: #{tpu_custom_call.1} parent=1 // pred_check_branch
      %14 = sbr.rel (0) target = $region9
    $region8: #{tpu_custom_call.1} parent=1 // pred_region
      %s16 = ssub.s32 8192, 8192
      %17 = vsyncadd [#allocation4], %s16
      %s18 = sshll.u32 [#allocation3], 4
      %s19 = int_to_ptr.vmem [resolvable:$true] %s18
      %24 = dma.hbm_to_vmem [thread:$0]  %s1, 8192, %s19, [#allocation4], 64, 64, 4
    $region9: #{tpu_custom_call.1} parent=1 // pred_fallthru
      _
    // Predicated region
    $region10: #{tpu_custom_call.1} parent=1 // pred_check
      _
    $region11: #{tpu_custom_call.1} parent=1 // pred_check_branch
      %26 = sbr.rel (0) target = $region13
    $region12: #{tpu_custom_call.1} parent=1 // pred_region
      _
    $region13: #{tpu_custom_call.1} parent=1 // pred_fallthru
      _
    // Predicated region
    $region14: #{tpu_custom_call.1} parent=1 // pred_check
      _
    $region15: #{tpu_custom_call.1} parent=1 // pred_check_branch
      %28 = sbr.rel (0) target = $region17
    $region16: #{tpu_custom_call.1} parent=1 // pred_region
      _
    $region17: #{tpu_custom_call.1} parent=1 // pred_fallthru
      _
    // Predicated region
    $region18: #{tpu_custom_call.1} parent=1 // pred_check
      _
    $region19: #{tpu_custom_call.1} parent=1 // pred_check_branch
      %30 = sbr.rel (0) target = $region21
    $region20: #{tpu_custom_call.1} parent=1 // pred_region
      %31 = dma.done [#allocation4], 8192
    $region21: #{tpu_custom_call.1} parent=1 // pred_fallthru
      _
    %p33 = scmp.eq.s32.totalorder 0, 0
    // Predicated region
    $region22: #{tpu_custom_call.1} parent=1 // pred_check
      %p34 = pneg %p33
    $region23: #{tpu_custom_call.1} parent=1 // pred_check_branch
      %36 = sbr.rel (%p34) target = $region25
    $region24: #{tpu_custom_call.1} parent=1 // pred_region
      %37 = vst [vmem:[#allocation2] sm:$0xff] 0.0
    $region25: #{tpu_custom_call.1} parent=1 // pred_fallthru
      _
    %v38 = vld [vmem:[#allocation2] sm:$0xff]
    %v39 = vld [vmem:[%s0] sm:$0xff]
    %v40 = vld [vmem:[%s0 + $0x8] sm:$0xff]
    %v41 = vld [vmem:[%s0 + $0x10] sm:$0xff]
    %v42 = vld [vmem:[%s0 + $0x18] sm:$0xff]
    %v43 = vld [vmem:[%s0 + $0x20] sm:$0xff]
    %v44 = vld [vmem:[%s0 + $0x28] sm:$0xff]
    %v45 = vld [vmem:[%s0 + $0x30] sm:$0xff]
    %v46 = vld [vmem:[%s0 + $0x38] sm:$0xff]
    %v47 = vpack.c.bf16 %v39, %v39
    %v48 = vpack.c.bf16 %v40, %v40
    %v49 = vpack.c.bf16 %v41, %v41
    %v50 = vpack.c.bf16 %v42, %v42
    %v51 = vpack.c.bf16 %v43, %v43
    %v52 = vpack.c.bf16 %v44, %v44
    %v53 = vpack.c.bf16 %v45, %v45
    %v54 = vpack.c.bf16 %v46, %v46
    %v55 = vld [vmem:[#allocation3] sm:$0xf]
    %v56 = vld [vmem:[#allocation3 + $0x4] sm:$0xf]
    %v57 = vld [vmem:[#allocation3 + $0x8] sm:$0xf]
    %v58 = vld [vmem:[#allocation3 + $0xc] sm:$0xf]
    %v59 = vld [vmem:[#allocation3 + $0x10] sm:$0xf]
    %v60 = vld [vmem:[#allocation3 + $0x14] sm:$0xf]
    %v61 = vld [vmem:[#allocation3 + $0x18] sm:$0xf]
    %v62 = vld [vmem:[#allocation3 + $0x1c] sm:$0xf]
    %v63 = vld [vmem:[#allocation3 + $0x20] sm:$0xf]
    %v64 = vld [vmem:[#allocation3 + $0x24] sm:$0xf]
    %v65 = vld [vmem:[#allocation3 + $0x28] sm:$0xf]
    %v66 = vld [vmem:[#allocation3 + $0x2c] sm:$0xf]
    %v67 = vld [vmem:[#allocation3 + $0x30] sm:$0xf]
    %v68 = vld [vmem:[#allocation3 + $0x34] sm:$0xf]
    %v69 = vld [vmem:[#allocation3 + $0x38] sm:$0xf]
    %v70 = vld [vmem:[#allocation3 + $0x3c] sm:$0xf]
    %v71 = vld [vmem:[#allocation3 + $0x40] sm:$0xf]
    %v72 = vld [vmem:[#allocation3 + $0x44] sm:$0xf]
    %v73 = vld [vmem:[#allocation3 + $0x48] sm:$0xf]
    %v74 = vld [vmem:[#allocation3 + $0x4c] sm:$0xf]
    %v75 = vld [vmem:[#allocation3 + $0x50] sm:$0xf]
    %v76 = vld [vmem:[#allocation3 + $0x54] sm:$0xf]
    %v77 = vld [vmem:[#allocation3 + $0x58] sm:$0xf]
    %v78 = vld [vmem:[#allocation3 + $0x5c] sm:$0xf]
    %v79 = vld [vmem:[#allocation3 + $0x60] sm:$0xf]
    %v80 = vld [vmem:[#allocation3 + $0x64] sm:$0xf]
    %v81 = vld [vmem:[#allocation3 + $0x68] sm:$0xf]
    %v82 = vld [vmem:[#allocation3 + $0x6c] sm:$0xf]
    %v83 = vld [vmem:[#allocation3 + $0x70] sm:$0xf]
    %v84 = vld [vmem:[#allocation3 + $0x74] sm:$0xf]
    %v85 = vld [vmem:[#allocation3 + $0x78] sm:$0xf]
    %v86 = vld [vmem:[#allocation3 + $0x7c] sm:$0xf]
    %v87 = vld [vmem:[#allocation3 + $0x80] sm:$0xf]
    %v88 = vld [vmem:[#allocation3 + $0x84] sm:$0xf]
    %v89 = vld [vmem:[#allocation3 + $0x88] sm:$0xf]
    %v90 = vld [vmem:[#allocation3 + $0x8c] sm:$0xf]
    %v91 = vld [vmem:[#allocation3 + $0x90] sm:$0xf]
    %v92 = vld [vmem:[#allocation3 + $0x94] sm:$0xf]
    %v93 = vld [vmem:[#allocation3 + $0x98] sm:$0xf]
    %v94 = vld [vmem:[#allocation3 + $0x9c] sm:$0xf]
    %v95 = vld [vmem:[#allocation3 + $0xa0] sm:$0xf]
    %v96 = vld [vmem:[#allocation3 + $0xa4] sm:$0xf]
    %v97 = vld [vmem:[#allocation3 + $0xa8] sm:$0xf]
    %v98 = vld [vmem:[#allocation3 + $0xac] sm:$0xf]
    %v99 = vld [vmem:[#allocation3 + $0xb0] sm:$0xf]
    %v100 = vld [vmem:[#allocation3 + $0xb4] sm:$0xf]
    %v101 = vld [vmem:[#allocation3 + $0xb8] sm:$0xf]
    %v102 = vld [vmem:[#allocation3 + $0xbc] sm:$0xf]
    %v103 = vld [vmem:[#allocation3 + $0xc0] sm:$0xf]
    %v104 = vld [vmem:[#allocation3 + $0xc4] sm:$0xf]
    %v105 = vld [vmem:[#allocation3 + $0xc8] sm:$0xf]
    %v106 = vld [vmem:[#allocation3 + $0xcc] sm:$0xf]
    %v107 = vld [vmem:[#allocation3 + $0xd0] sm:$0xf]
    %v108 = vld [vmem:[#allocation3 + $0xd4] sm:$0xf]
    %v109 = vld [vmem:[#allocation3 + $0xd8] sm:$0xf]
    %v110 = vld [vmem:[#allocation3 + $0xdc] sm:$0xf]
    %v111 = vld [vmem:[#allocation3 + $0xe0] sm:$0xf]
    %v112 = vld [vmem:[#allocation3 + $0xe4] sm:$0xf]
    %v113 = vld [vmem:[#allocation3 + $0xe8] sm:$0xf]
    %v114 = vld [vmem:[#allocation3 + $0xec] sm:$0xf]
    %v115 = vld [vmem:[#allocation3 + $0xf0] sm:$0xf]
    %v116 = vld [vmem:[#allocation3 + $0xf4] sm:$0xf]
    %v117 = vld [vmem:[#allocation3 + $0xf8] sm:$0xf]
    %v118 = vld [vmem:[#allocation3 + $0xfc] sm:$0xf]
    %v119 = vld [vmem:[#allocation3 + $0x100] sm:$0xf]
    %v120 = vld [vmem:[#allocation3 + $0x104] sm:$0xf]
    %v121 = vld [vmem:[#allocation3 + $0x108] sm:$0xf]
    %v122 = vld [vmem:[#allocation3 + $0x10c] sm:$0xf]
    %v123 = vld [vmem:[#allocation3 + $0x110] sm:$0xf]
    %v124 = vld [vmem:[#allocation3 + $0x114] sm:$0xf]
    %v125 = vld [vmem:[#allocation3 + $0x118] sm:$0xf]
    %v126 = vld [vmem:[#allocation3 + $0x11c] sm:$0xf]
    %v127 = vld [vmem:[#allocation3 + $0x120] sm:$0xf]
    %v128 = vld [vmem:[#allocation3 + $0x124] sm:$0xf]
    %v129 = vld [vmem:[#allocation3 + $0x128] sm:$0xf]
    %v130 = vld [vmem:[#allocation3 + $0x12c] sm:$0xf]
    %v131 = vld [vmem:[#allocation3 + $0x130] sm:$0xf]
    %v132 = vld [vmem:[#allocation3 + $0x134] sm:$0xf]
    %v133 = vld [vmem:[#allocation3 + $0x138] sm:$0xf]
    %v134 = vld [vmem:[#allocation3 + $0x13c] sm:$0xf]
    %v135 = vld [vmem:[#allocation3 + $0x140] sm:$0xf]
    %v136 = vld [vmem:[#allocation3 + $0x144] sm:$0xf]
    %v137 = vld [vmem:[#allocation3 + $0x148] sm:$0xf]
    %v138 = vld [vmem:[#allocation3 + $0x14c] sm:$0xf]
    %v139 = vld [vmem:[#allocation3 + $0x150] sm:$0xf]
    %v140 = vld [vmem:[#allocation3 + $0x154] sm:$0xf]
    %v141 = vld [vmem:[#allocation3 + $0x158] sm:$0xf]
    %v142 = vld [vmem:[#allocation3 + $0x15c] sm:$0xf]
    %v143 = vld [vmem:[#allocation3 + $0x160] sm:$0xf]
    %v144 = vld [vmem:[#allocation3 + $0x164] sm:$0xf]
    %v145 = vld [vmem:[#allocation3 + $0x168] sm:$0xf]
    %v146 = vld [vmem:[#allocation3 + $0x16c] sm:$0xf]
    %v147 = vld [vmem:[#allocation3 + $0x170] sm:$0xf]
    %v148 = vld [vmem:[#allocation3 + $0x174] sm:$0xf]
    %v149 = vld [vmem:[#allocation3 + $0x178] sm:$0xf]
    %v150 = vld [vmem:[#allocation3 + $0x17c] sm:$0xf]
    %v151 = vld [vmem:[#allocation3 + $0x180] sm:$0xf]
    %v152 = vld [vmem:[#allocation3 + $0x184] sm:$0xf]
    %v153 = vld [vmem:[#allocation3 + $0x188] sm:$0xf]
    %v154 = vld [vmem:[#allocation3 + $0x18c] sm:$0xf]
    %v155 = vld [vmem:[#allocation3 + $0x190] sm:$0xf]
    %v156 = vld [vmem:[#allocation3 + $0x194] sm:$0xf]
    %v157 = vld [vmem:[#allocation3 + $0x198] sm:$0xf]
    %v158 = vld [vmem:[#allocation3 + $0x19c] sm:$0xf]
    %v159 = vld [vmem:[#allocation3 + $0x1a0] sm:$0xf]
    %v160 = vld [vmem:[#allocation3 + $0x1a4] sm:$0xf]
    %v161 = vld [vmem:[#allocation3 + $0x1a8] sm:$0xf]
    %v162 = vld [vmem:[#allocation3 + $0x1ac] sm:$0xf]
    %v163 = vld [vmem:[#allocation3 + $0x1b0] sm:$0xf]
    %v164 = vld [vmem:[#allocation3 + $0x1b4] sm:$0xf]
    %v165 = vld [vmem:[#allocation3 + $0x1b8] sm:$0xf]
    %v166 = vld [vmem:[#allocation3 + $0x1bc] sm:$0xf]
    %v167 = vld [vmem:[#allocation3 + $0x1c0] sm:$0xf]
    %v168 = vld [vmem:[#allocation3 + $0x1c4] sm:$0xf]
    %v169 = vld [vmem:[#allocation3 + $0x1c8] sm:$0xf]
    %v170 = vld [vmem:[#allocation3 + $0x1cc] sm:$0xf]
    %v171 = vld [vmem:[#allocation3 + $0x1d0] sm:$0xf]
    %v172 = vld [vmem:[#allocation3 + $0x1d4] sm:$0xf]
    %v173 = vld [vmem:[#allocation3 + $0x1d8] sm:$0xf]
    %v174 = vld [vmem:[#allocation3 + $0x1dc] sm:$0xf]
    %v175 = vld [vmem:[#allocation3 + $0x1e0] sm:$0xf]
    %v176 = vld [vmem:[#allocation3 + $0x1e4] sm:$0xf]
    %v177 = vld [vmem:[#allocation3 + $0x1e8] sm:$0xf]
    %v178 = vld [vmem:[#allocation3 + $0x1ec] sm:$0xf]
    %v179 = vld [vmem:[#allocation3 + $0x1f0] sm:$0xf]
    %v180 = vld [vmem:[#allocation3 + $0x1f4] sm:$0xf]
    %v181 = vld [vmem:[#allocation3 + $0x1f8] sm:$0xf]
    %v182 = vld [vmem:[#allocation3 + $0x1fc] sm:$0xf]
    %v311 = vunpack.c.l.b16 %v55
    %v312 = vunpack.c.l.b16 %v56
    %v313 = vunpack.c.l.b16 %v57
    %v314 = vunpack.c.l.b16 %v58
    %v315 = vunpack.c.l.b16 %v59
    %v316 = vunpack.c.l.b16 %v60
    %v317 = vunpack.c.l.b16 %v61
    %v318 = vunpack.c.l.b16 %v62
    %v319 = vunpack.c.l.b16 %v63
    %v320 = vunpack.c.l.b16 %v64
    %v321 = vunpack.c.l.b16 %v65
    %v322 = vunpack.c.l.b16 %v66
    %v323 = vunpack.c.l.b16 %v67
    %v324 = vunpack.c.l.b16 %v68
    %v325 = vunpack.c.l.b16 %v69
    %v326 = vunpack.c.l.b16 %v70
    %v327 = vunpack.c.l.b16 %v71
    %v328 = vunpack.c.l.b16 %v72
    %v329 = vunpack.c.l.b16 %v73
    %v330 = vunpack.c.l.b16 %v74
    %v331 = vunpack.c.l.b16 %v75
    %v332 = vunpack.c.l.b16 %v76
    %v333 = vunpack.c.l.b16 %v77
    %v334 = vunpack.c.l.b16 %v78
    %v335 = vunpack.c.l.b16 %v79
    %v336 = vunpack.c.l.b16 %v80
    %v337 = vunpack.c.l.b16 %v81
    %v338 = vunpack.c.l.b16 %v82
    %v339 = vunpack.c.l.b16 %v83
    %v340 = vunpack.c.l.b16 %v84
    %v341 = vunpack.c.l.b16 %v85
    %v342 = vunpack.c.l.b16 %v86
    %v343 = vunpack.c.l.b16 %v87
    %v344 = vunpack.c.l.b16 %v88
    %v345 = vunpack.c.l.b16 %v89
    %v346 = vunpack.c.l.b16 %v90
    %v347 = vunpack.c.l.b16 %v91
    %v348 = vunpack.c.l.b16 %v92
    %v349 = vunpack.c.l.b16 %v93
    %v350 = vunpack.c.l.b16 %v94
    %v351 = vunpack.c.l.b16 %v95
    %v352 = vunpack.c.l.b16 %v96
    %v353 = vunpack.c.l.b16 %v97
    %v354 = vunpack.c.l.b16 %v98
    %v355 = vunpack.c.l.b16 %v99
    %v356 = vunpack.c.l.b16 %v100
    %v357 = vunpack.c.l.b16 %v101
    %v358 = vunpack.c.l.b16 %v102
    %v359 = vunpack.c.l.b16 %v103
    %v360 = vunpack.c.l.b16 %v104
    %v361 = vunpack.c.l.b16 %v105
    %v362 = vunpack.c.l.b16 %v106
    %v363 = vunpack.c.l.b16 %v107
    %v364 = vunpack.c.l.b16 %v108
    %v365 = vunpack.c.l.b16 %v109
    %v366 = vunpack.c.l.b16 %v110
    %v367 = vunpack.c.l.b16 %v111
    %v368 = vunpack.c.l.b16 %v112
    %v369 = vunpack.c.l.b16 %v113
    %v370 = vunpack.c.l.b16 %v114
    %v371 = vunpack.c.l.b16 %v115
    %v372 = vunpack.c.l.b16 %v116
    %v373 = vunpack.c.l.b16 %v117
    %v374 = vunpack.c.l.b16 %v118
    %v375 = vunpack.c.l.b16 %v119
    %v376 = vunpack.c.l.b16 %v120
    %v377 = vunpack.c.l.b16 %v121
    %v378 = vunpack.c.l.b16 %v122
    %v379 = vunpack.c.l.b16 %v123
    %v380 = vunpack.c.l.b16 %v124
    %v381 = vunpack.c.l.b16 %v125
    %v382 = vunpack.c.l.b16 %v126
    %v383 = vunpack.c.l.b16 %v127
    %v384 = vunpack.c.l.b16 %v128
    %v385 = vunpack.c.l.b16 %v129
    %v386 = vunpack.c.l.b16 %v130
    %v387 = vunpack.c.l.b16 %v131
    %v388 = vunpack.c.l.b16 %v132
    %v389 = vunpack.c.l.b16 %v133
    %v390 = vunpack.c.l.b16 %v134
    %v391 = vunpack.c.l.b16 %v135
    %v392 = vunpack.c.l.b16 %v136
    %v393 = vunpack.c.l.b16 %v137
    %v394 = vunpack.c.l.b16 %v138
    %v395 = vunpack.c.l.b16 %v139
    %v396 = vunpack.c.l.b16 %v140
    %v397 = vunpack.c.l.b16 %v141
    %v398 = vunpack.c.l.b16 %v142
    %v399 = vunpack.c.l.b16 %v143
    %v400 = vunpack.c.l.b16 %v144
    %v401 = vunpack.c.l.b16 %v145
    %v402 = vunpack.c.l.b16 %v146
    %v403 = vunpack.c.l.b16 %v147
    %v404 = vunpack.c.l.b16 %v148
    %v405 = vunpack.c.l.b16 %v149
    %v406 = vunpack.c.l.b16 %v150
    %v407 = vunpack.c.l.b16 %v151
    %v408 = vunpack.c.l.b16 %v152
    %v409 = vunpack.c.l.b16 %v153
    %v410 = vunpack.c.l.b16 %v154
    %v411 = vunpack.c.l.b16 %v155
    %v412 = vunpack.c.l.b16 %v156
    %v413 = vunpack.c.l.b16 %v157
    %v414 = vunpack.c.l.b16 %v158
    %v415 = vunpack.c.l.b16 %v159
    %v416 = vunpack.c.l.b16 %v160
    %v417 = vunpack.c.l.b16 %v161
    %v418 = vunpack.c.l.b16 %v162
    %v419 = vunpack.c.l.b16 %v163
    %v420 = vunpack.c.l.b16 %v164
    %v421 = vunpack.c.l.b16 %v165
    %v422 = vunpack.c.l.b16 %v166
    %v423 = vunpack.c.l.b16 %v167
    %v424 = vunpack.c.l.b16 %v168
    %v425 = vunpack.c.l.b16 %v169
    %v426 = vunpack.c.l.b16 %v170
    %v427 = vunpack.c.l.b16 %v171
    %v428 = vunpack.c.l.b16 %v172
    %v429 = vunpack.c.l.b16 %v173
    %v430 = vunpack.c.l.b16 %v174
    %v431 = vunpack.c.l.b16 %v175
    %v432 = vunpack.c.l.b16 %v176
    %v433 = vunpack.c.l.b16 %v177
    %v434 = vunpack.c.l.b16 %v178
    %v435 = vunpack.c.l.b16 %v179
    %v436 = vunpack.c.l.b16 %v180
    %v437 = vunpack.c.l.b16 %v181
    %v438 = vunpack.c.l.b16 %v182
    %v439 = vpack.c.b16 %v312, %v311
    %v440 = vpack.c.b16 %v314, %v313
    %v441 = vpack.c.b16 %v316, %v315
    %v442 = vpack.c.b16 %v318, %v317
    %v443 = vpack.c.b16 %v320, %v319
    %v444 = vpack.c.b16 %v322, %v321
    %v445 = vpack.c.b16 %v324, %v323
    %v446 = vpack.c.b16 %v326, %v325
    %v447 = vpack.c.b16 %v328, %v327
    %v448 = vpack.c.b16 %v330, %v329
    %v449 = vpack.c.b16 %v332, %v331
    %v450 = vpack.c.b16 %v334, %v333
    %v451 = vpack.c.b16 %v336, %v335
    %v452 = vpack.c.b16 %v338, %v337
    %v453 = vpack.c.b16 %v340, %v339
    %v454 = vpack.c.b16 %v342, %v341
    %v455 = vpack.c.b16 %v344, %v343
    %v456 = vpack.c.b16 %v346, %v345
    %v457 = vpack.c.b16 %v348, %v347
    %v458 = vpack.c.b16 %v350, %v349
    %v459 = vpack.c.b16 %v352, %v351
    %v460 = vpack.c.b16 %v354, %v353
    %v461 = vpack.c.b16 %v356, %v355
    %v462 = vpack.c.b16 %v358, %v357
    %v463 = vpack.c.b16 %v360, %v359
    %v464 = vpack.c.b16 %v362, %v361
    %v465 = vpack.c.b16 %v364, %v363
    %v466 = vpack.c.b16 %v366, %v365
    %v467 = vpack.c.b16 %v368, %v367
    %v468 = vpack.c.b16 %v370, %v369
    %v469 = vpack.c.b16 %v372, %v371
    %v470 = vpack.c.b16 %v374, %v373
    %v471 = vpack.c.b16 %v376, %v375
    %v472 = vpack.c.b16 %v378, %v377
    %v473 = vpack.c.b16 %v380, %v379
    %v474 = vpack.c.b16 %v382, %v381
    %v475 = vpack.c.b16 %v384, %v383
    %v476 = vpack.c.b16 %v386, %v385
    %v477 = vpack.c.b16 %v388, %v387
    %v478 = vpack.c.b16 %v390, %v389
    %v479 = vpack.c.b16 %v392, %v391
    %v480 = vpack.c.b16 %v394, %v393
    %v481 = vpack.c.b16 %v396, %v395
    %v482 = vpack.c.b16 %v398, %v397
    %v483 = vpack.c.b16 %v400, %v399
    %v484 = vpack.c.b16 %v402, %v401
    %v485 = vpack.c.b16 %v404, %v403
    %v486 = vpack.c.b16 %v406, %v405
    %v487 = vpack.c.b16 %v408, %v407
    %v488 = vpack.c.b16 %v410, %v409
    %v489 = vpack.c.b16 %v412, %v411
    %v490 = vpack.c.b16 %v414, %v413
    %v491 = vpack.c.b16 %v416, %v415
    %v492 = vpack.c.b16 %v418, %v417
    %v493 = vpack.c.b16 %v420, %v419
    %v494 = vpack.c.b16 %v422, %v421
    %v495 = vpack.c.b16 %v424, %v423
    %v496 = vpack.c.b16 %v426, %v425
    %v497 = vpack.c.b16 %v428, %v427
    %v498 = vpack.c.b16 %v430, %v429
    %v499 = vpack.c.b16 %v432, %v431
    %v500 = vpack.c.b16 %v434, %v433
    %v501 = vpack.c.b16 %v436, %v435
    %v502 = vpack.c.b16 %v438, %v437
    %567 = vmatprep.subr.bf16.mxu0 0
    %568 = vmatpush1.bf16.msra.mxu0 %v439
    %569 = vmatprep.subr.bf16.mxu0 0
    %570 = vmatpush1.bf16.msra.mxu0 %v440
    %571 = vmatprep.subr.bf16.mxu0 0
    %572 = vmatpush1.bf16.msra.mxu0 %v441
    %573 = vmatprep.subr.bf16.mxu0 0
    %574 = vmatpush1.bf16.msra.mxu0 %v442
    %575 = vmatprep.subr.bf16.mxu0 0
    %576 = vmatpush1.bf16.msra.mxu0 %v443
    %577 = vmatprep.subr.bf16.mxu0 0
    %578 = vmatpush1.bf16.msra.mxu0 %v444
    %579 = vmatprep.subr.bf16.mxu0 0
    %580 = vmatpush1.bf16.msra.mxu0 %v445
    %581 = vmatprep.subr.bf16.mxu0 0
    %582 = vmatpush1.bf16.msra.mxu0 %v446
    %583 = vmatprep.subr.bf16.mxu0 0
    %584 = vmatpush1.bf16.msra.mxu0 %v447
    %585 = vmatprep.subr.bf16.mxu0 0
    %586 = vmatpush1.bf16.msra.mxu0 %v448
    %587 = vmatprep.subr.bf16.mxu0 0
    %588 = vmatpush1.bf16.msra.mxu0 %v449
    %589 = vmatprep.subr.bf16.mxu0 0
    %590 = vmatpush1.bf16.msra.mxu0 %v450
    %591 = vmatprep.subr.bf16.mxu0 0
    %592 = vmatpush1.bf16.msra.mxu0 %v451
    %593 = vmatprep.subr.bf16.mxu0 0
    %594 = vmatpush1.bf16.msra.mxu0 %v452
    %595 = vmatprep.subr.bf16.mxu0 0
    %596 = vmatpush1.bf16.msra.mxu0 %v453
    %597 = vmatprep.subr.bf16.mxu0 0
    %598 = vmatpush1.bf16.msra.mxu0 %v454
    %599 = vmatprep.mubr.bf16.mxu0 %v48
    %600 = vmatmul.mubr.bf16.gmra.mrb[0].mxu0 %v47
    %v601 = vpop.f32.mrb[0].mxu0
    %v602 = vadd.f32 0.0, %v601
    %v603 = vpop.f32.mrb[0].mxu0
    %v604 = vpop.f32.mrb[0].mxu0
    %v605 = vpop.f32.mrb[0].mxu0
    %606 = vdwg.mxu0
    %607 = vmatprep.subr.bf16.mxu0 0
    %608 = vmatpush1.bf16.msra.mxu0 %v455
    %609 = vmatprep.subr.bf16.mxu0 0
    %610 = vmatpush1.bf16.msra.mxu0 %v456
    %611 = vmatprep.subr.bf16.mxu0 0
    %612 = vmatpush1.bf16.msra.mxu0 %v457
    %613 = vmatprep.subr.bf16.mxu0 0
    %614 = vmatpush1.bf16.msra.mxu0 %v458
    %615 = vmatprep.subr.bf16.mxu0 0
    %616 = vmatpush1.bf16.msra.mxu0 %v459
    %617 = vmatprep.subr.bf16.mxu0 0
    %618 = vmatpush1.bf16.msra.mxu0 %v460
    %619 = vmatprep.subr.bf16.mxu0 0
    %620 = vmatpush1.bf16.msra.mxu0 %v461
    %621 = vmatprep.subr.bf16.mxu0 0
    %622 = vmatpush1.bf16.msra.mxu0 %v462
    %623 = vmatprep.subr.bf16.mxu0 0
    %624 = vmatpush1.bf16.msra.mxu0 %v463
    %625 = vmatprep.subr.bf16.mxu0 0
    %626 = vmatpush1.bf16.msra.mxu0 %v464
    %627 = vmatprep.subr.bf16.mxu0 0
    %628 = vmatpush1.bf16.msra.mxu0 %v465
    %629 = vmatprep.subr.bf16.mxu0 0
    %630 = vmatpush1.bf16.msra.mxu0 %v466
    %631 = vmatprep.subr.bf16.mxu0 0
    %632 = vmatpush1.bf16.msra.mxu0 %v467
    %633 = vmatprep.subr.bf16.mxu0 0
    %634 = vmatpush1.bf16.msra.mxu0 %v468
    %635 = vmatprep.subr.bf16.mxu0 0
    %636 = vmatpush1.bf16.msra.mxu0 %v469
    %637 = vmatprep.subr.bf16.mxu0 0
    %638 = vmatpush1.bf16.msra.mxu0 %v470
    %639 = vmatprep.mubr.bf16.mxu0 %v50
    %640 = vmatmul.mubr.bf16.gmra.mrb[0].mxu0 %v49
    %v641 = vpop.f32.mrb[0].mxu0
    %v642 = vadd.f32 %v602, %v641
    %v643 = vpop.f32.mrb[0].mxu0
    %v644 = vpop.f32.mrb[0].mxu0
    %v645 = vpop.f32.mrb[0].mxu0
    %646 = vdwg.mxu0
    %647 = vmatprep.subr.bf16.mxu0 0
    %648 = vmatpush1.bf16.msra.mxu0 %v471
    %649 = vmatprep.subr.bf16.mxu0 0
    %650 = vmatpush1.bf16.msra.mxu0 %v472
    %651 = vmatprep.subr.bf16.mxu0 0
    %652 = vmatpush1.bf16.msra.mxu0 %v473
    %653 = vmatprep.subr.bf16.mxu0 0
    %654 = vmatpush1.bf16.msra.mxu0 %v474
    %655 = vmatprep.subr.bf16.mxu0 0
    %656 = vmatpush1.bf16.msra.mxu0 %v475
    %657 = vmatprep.subr.bf16.mxu0 0
    %658 = vmatpush1.bf16.msra.mxu0 %v476
    %659 = vmatprep.subr.bf16.mxu0 0
    %660 = vmatpush1.bf16.msra.mxu0 %v477
    %661 = vmatprep.subr.bf16.mxu0 0
    %662 = vmatpush1.bf16.msra.mxu0 %v478
    %663 = vmatprep.subr.bf16.mxu0 0
    %664 = vmatpush1.bf16.msra.mxu0 %v479
    %665 = vmatprep.subr.bf16.mxu0 0
    %666 = vmatpush1.bf16.msra.mxu0 %v480
    %667 = vmatprep.subr.bf16.mxu0 0
    %668 = vmatpush1.bf16.msra.mxu0 %v481
    %669 = vmatprep.subr.bf16.mxu0 0
    %670 = vmatpush1.bf16.msra.mxu0 %v482
    %671 = vmatprep.subr.bf16.mxu0 0
    %672 = vmatpush1.bf16.msra.mxu0 %v483
    %673 = vmatprep.subr.bf16.mxu0 0
    %674 = vmatpush1.bf16.msra.mxu0 %v484
    %675 = vmatprep.subr.bf16.mxu0 0
    %676 = vmatpush1.bf16.msra.mxu0 %v485
    %677 = vmatprep.subr.bf16.mxu0 0
    %678 = vmatpush1.bf16.msra.mxu0 %v486
    %679 = vmatprep.mubr.bf16.mxu0 %v52
    %680 = vmatmul.mubr.bf16.gmra.mrb[0].mxu0 %v51
    %v681 = vpop.f32.mrb[0].mxu0
    %v682 = vadd.f32 %v642, %v681
    %v683 = vpop.f32.mrb[0].mxu0
    %v684 = vpop.f32.mrb[0].mxu0
    %v685 = vpop.f32.mrb[0].mxu0
    %686 = vdwg.mxu0
    %687 = vmatprep.subr.bf16.mxu0 0
    %688 = vmatpush1.bf16.msra.mxu0 %v487
    %689 = vmatprep.subr.bf16.mxu0 0
    %690 = vmatpush1.bf16.msra.mxu0 %v488
    %691 = vmatprep.subr.bf16.mxu0 0
    %692 = vmatpush1.bf16.msra.mxu0 %v489
    %693 = vmatprep.subr.bf16.mxu0 0
    %694 = vmatpush1.bf16.msra.mxu0 %v490
    %695 = vmatprep.subr.bf16.mxu0 0
    %696 = vmatpush1.bf16.msra.mxu0 %v491
    %697 = vmatprep.subr.bf16.mxu0 0
    %698 = vmatpush1.bf16.msra.mxu0 %v492
    %699 = vmatprep.subr.bf16.mxu0 0
    %700 = vmatpush1.bf16.msra.mxu0 %v493
    %701 = vmatprep.subr.bf16.mxu0 0
    %702 = vmatpush1.bf16.msra.mxu0 %v494
    %703 = vmatprep.subr.bf16.mxu0 0
    %704 = vmatpush1.bf16.msra.mxu0 %v495
    %705 = vmatprep.subr.bf16.mxu0 0
    %706 = vmatpush1.bf16.msra.mxu0 %v496
    %707 = vmatprep.subr.bf16.mxu0 0
    %708 = vmatpush1.bf16.msra.mxu0 %v497
    %709 = vmatprep.subr.bf16.mxu0 0
    %710 = vmatpush1.bf16.msra.mxu0 %v498
    %711 = vmatprep.subr.bf16.mxu0 0
    %712 = vmatpush1.bf16.msra.mxu0 %v499
    %713 = vmatprep.subr.bf16.mxu0 0
    %714 = vmatpush1.bf16.msra.mxu0 %v500
    %715 = vmatprep.subr.bf16.mxu0 0
    %716 = vmatpush1.bf16.msra.mxu0 %v501
    %717 = vmatprep.subr.bf16.mxu0 0
    %718 = vmatpush1.bf16.msra.mxu0 %v502
    %719 = vmatprep.mubr.bf16.mxu0 %v54
    %720 = vmatmul.mubr.bf16.gmra.mrb[0].mxu0 %v53
    %v721 = vpop.f32.mrb[0].mxu0
    %v722 = vadd.f32 %v682, %v721
    %v723 = vpop.f32.mrb[0].mxu0
    %v724 = vpop.f32.mrb[0].mxu0
    %v725 = vpop.f32.mrb[0].mxu0
    %726 = vdwg.mxu0
    %v727 = vadd.f32 %v38, %v722
    %728 = vst [vmem:[#allocation2] sm:$0xff] %v727
    // Predicated region
    $region26: #{tpu_custom_call.1} parent=1 // pred_check
      %p729 = pneg %p33
    $region27: #{tpu_custom_call.1} parent=1 // pred_check_branch
      %731 = sbr.rel (%p729) target = $region29
    $region28: #{tpu_custom_call.1} parent=1 // pred_region
      %v732 = vld [vmem:[#allocation2] sm:$0xff]
      %v733 = vld [vmem:[%s2] sm:$0xff]
      %v734 = vld [vmem:[%s2 + $0x8] sm:$0xff]
      %v735 = vld [vmem:[%s2 + $0x10] sm:$0xff]
      %v736 = vld [vmem:[%s2 + $0x18] sm:$0xff]
      %v737 = vld [vmem:[%s2 + $0x20] sm:$0xff]
      %v738 = vld [vmem:[%s2 + $0x28] sm:$0xff]
      %v739 = vld [vmem:[%s2 + $0x30] sm:$0xff]
      %v740 = vld [vmem:[%s2 + $0x38] sm:$0xff]
      %v741 = vld [vmem:[%s2 + $0x40] sm:$0xff]
      %v742 = vld [vmem:[%s2 + $0x48] sm:$0xff]
      %v743 = vld [vmem:[%s2 + $0x50] sm:$0xff]
      %v744 = vld [vmem:[%s2 + $0x58] sm:$0xff]
      %v745 = vld [vmem:[%s2 + $0x60] sm:$0xff]
      %v746 = vld [vmem:[%s2 + $0x68] sm:$0xff]
      %v747 = vld [vmem:[%s2 + $0x70] sm:$0xff]
      %v748 = vld [vmem:[%s2 + $0x78] sm:$0xff]
      %749 = vmatprep.subr.mxu0 0.0
      %750 = vmatpush1.msra.mxu0 %v733
      %751 = vmatprep.subr.mxu0 0.0
      %752 = vmatpush1.msra.mxu0 %v734
      %753 = vmatprep.subr.mxu0 0.0
      %754 = vmatpush1.msra.mxu0 %v735
      %755 = vmatprep.subr.mxu0 0.0
      %756 = vmatpush1.msra.mxu0 %v736
      %757 = vmatprep.subr.mxu0 0.0
      %758 = vmatpush1.msra.mxu0 %v737
      %759 = vmatprep.subr.mxu0 0.0
      %760 = vmatpush1.msra.mxu0 %v738
      %761 = vmatprep.subr.mxu0 0.0
      %762 = vmatpush1.msra.mxu0 %v739
      %763 = vmatprep.subr.mxu0 0.0
      %764 = vmatpush1.msra.mxu0 %v740
      %765 = vmatprep.subr.mxu0 0.0
      %766 = vmatpush1.msra.mxu0 %v741
      %767 = vmatprep.subr.mxu0 0.0
      %768 = vmatpush1.msra.mxu0 %v742
      %769 = vmatprep.subr.mxu0 0.0
      %770 = vmatpush1.msra.mxu0 %v743
      %771 = vmatprep.subr.mxu0 0.0
      %772 = vmatpush1.msra.mxu0 %v744
      %773 = vmatprep.subr.mxu0 0.0
      %774 = vmatpush1.msra.mxu0 %v745
      %775 = vmatprep.subr.mxu0 0.0
      %776 = vmatpush1.msra.mxu0 %v746
      %777 = vmatprep.subr.mxu0 0.0
      %778 = vmatpush1.msra.mxu0 %v747
      %779 = vmatprep.subr.mxu0 0.0
      %780 = vmatpush1.msra.mxu0 %v748
      %781 = vmatprep.subr.mxu0 0.0
      %782 = vmatpush1.msra.mxu0 0.0
      %783 = vmatprep.subr.mxu0 0.0
      %784 = vmatpush1.msra.mxu0 0.0
      %785 = vmatprep.subr.mxu0 0.0
      %786 = vmatpush1.msra.mxu0 0.0
      %787 = vmatprep.subr.mxu0 0.0
      %788 = vmatpush1.msra.mxu0 0.0
      %789 = vmatprep.subr.mxu0 0.0
      %790 = vmatpush1.msra.mxu0 0.0
      %791 = vmatprep.subr.mxu0 0.0
      %792 = vmatpush1.msra.mxu0 0.0
      %793 = vmatprep.subr.mxu0 0.0
      %794 = vmatpush1.msra.mxu0 0.0
      %795 = vmatprep.subr.mxu0 0.0
      %796 = vmatpush1.msra.mxu0 0.0
      %797 = vmatprep.subr.mxu0 0.0
      %798 = vmatpush1.msra.mxu0 0.0
      %799 = vmatprep.subr.mxu0 0.0
      %800 = vmatpush1.msra.mxu0 0.0
      %801 = vmatprep.subr.mxu0 0.0
      %802 = vmatpush1.msra.mxu0 0.0
      %803 = vmatprep.subr.mxu0 0.0
      %804 = vmatpush1.msra.mxu0 0.0
      %805 = vmatprep.subr.mxu0 0.0
      %806 = vmatpush1.msra.mxu0 0.0
      %807 = vmatprep.subr.mxu0 0.0
      %808 = vmatpush1.msra.mxu0 0.0
      %809 = vmatprep.subr.mxu0 0.0
      %810 = vmatpush1.msra.mxu0 0.0
      %811 = vmatprep.subr.mxu0 0.0
      %812 = vmatpush1.msra.mxu0 0.0
      %813 = vmatprep.mubr.f32.mxu0 0.0
      %814 = vmatmul.mubr.f32.gmra.mrb[0].mxu0 %v732
      %v815 = vpop.f32.mrb[0].mxu0
      %v816 = vadd.f32 0.0, %v815
      %v817 = vpop.f32.mrb[0].mxu0
      %818 = vdwg.mxu0
      %v819 = vmul.f32 %v732, %v732
      %820 = vadd.xlane.f32.xlu0 %v819
      %v821 = vpop.xlane.xlu0 %820
      %v822 = vrsqrt.pop %v821
      %v823 = vmul.f32 %v821, %v822
      %vm824 = vcmp.eq.f32.partialorder %v821, inf
      %v825 = vsel %vm824, %v821, %v823
      %vm826 = vcmp.eq.f32.partialorder %v821, 0.0
      %v827 = vand.u32 %v821, 2147483648
      %v828 = vsel %vm826, %v827, %v825
      %v829 = vld [vmem:[%s3] sm:$0x1]
      %v831 = vlaneseq
      %v832 = vshrl.u32 %v831, 7
      %v833 = vsub.s32 0, %v832
      %v834 = vrot.slane %v829, %v833
      %v836 = vmul.f32 %v828, %v834
      %v837 = vmax.f32 %v836, 1e-08
      %v838 = vrcp.pop %v837
      %v839 = vmul.f32 %v816, %v838
      %v840 = vmul.f32 %v839, 1.442695
      %v841 = vpow.pop %v840
      %vm842 = vcmask 64512
      %v843 = vsel %vm842, %v841, 0.0
      %844 = vadd.xlane.f32.xlu0 %v843
      %v845 = vpop.xlane.xlu0 %844
      %v846 = vrcp.pop %v845
      %v847 = vmul.f32 %v841, %v846
      %848 = vst.msk [vmem:[#allocation6] sm:$0xff] %vm842, %v847
    $region29: #{tpu_custom_call.1} parent=1 // pred_fallthru
      _
    // Predicated region
    $region30: #{tpu_custom_call.1} parent=1 // pred_check
      _
    $region31: #{tpu_custom_call.1} parent=1 // pred_check_branch
      %850 = sbr.rel (0) target = $region33
    $region32: #{tpu_custom_call.1} parent=1 // pred_region
      %s852 = ssub.s32 128, 128
      %853 = vsyncadd [#allocation5], %s852
      %s855 = sshll.u32 [#allocation6], 4
      %s856 = int_to_ptr.vmem [resolvable:$true] %s855
      %858 = dma.vmem_to_hbm [thread:$0]  %s856, 128, %s4, [#allocation5]
    $region33: #{tpu_custom_call.1} parent=1 // pred_fallthru
      _
    // Predicated region
    $region34: #{tpu_custom_call.1} parent=1 // pred_check
      _
    $region35: #{tpu_custom_call.1} parent=1 // pred_check_branch
      %860 = sbr.rel (0) target = $region37
    $region36: #{tpu_custom_call.1} parent=1 // pred_region
      %861 = dma.done [#allocation5], 128
    $region37: #{tpu_custom_call.1} parent=1 // pred_fallthru
      _
    %862 = vsyncpa [#allocation4], 1
    %863 = vsyncpa [#allocation5], 1

</llo_original>
